<compile_context>
chip_gen: v7x
topology: tpu7x:2x2x1
jax: 0.10.0
libtpu: 0.0.40
codegen_flags: <defaults>
</compile_context>

<pallas_src>
import functools

import jax
import jax.numpy as jnp
from jax.experimental import pallas as pl
from jax.experimental.pallas import tpu as pltpu


# ----------------------------------------------------------------------------
# Kernel A: row-tiled, pipelined  out = x_packed @ W_blockdiag + bias_packed
# ----------------------------------------------------------------------------
def _gemm_kernel(xp_ref, wp_ref, bp_ref, out_ref):
    out_ref[...] = (
        jnp.dot(xp_ref[...], wp_ref[...], preferred_element_type=jnp.float32)
        + bp_ref[...]
    ).astype(out_ref.dtype)


# ----------------------------------------------------------------------------
# Kernel B: attention correction for the first N rows (the only nodes that
# actually receive edges, see module semantics above).  Runs once, tiny.
# ----------------------------------------------------------------------------
def _attn_kernel(x0_ref, adjT_ref, w_ref, att_src_ref, att_dst_ref,
                 w_edge_ref, att_edge_ref, bias_ref, out_ref,
                 *, n_nodes, n_copies):
    N = n_nodes
    S = float(n_copies)  # multiplicity of every real edge in its softmax group

    h0 = jnp.dot(x0_ref[...], w_ref[...],
                 preferred_element_type=jnp.float32)             # (N, F)
    adjT = adjT_ref[...]                                         # (N, N), adjT[i,j] = adj[j,i]

    att_src = att_src_ref[...]                                   # (1, F)
    att_dst = att_dst_ref[...]                                   # (1, F)
    # edge_dim = 1 -> alpha_edge(e) = e * sum(lin_edge_weight * att_edge)
    c_edge = jnp.sum(w_edge_ref[...] * att_edge_ref[...], keepdims=True)  # (1, 1)

    a_src_col = jnp.sum(h0 * att_src, axis=1, keepdims=True)     # (N, 1)
    a_dst_col = jnp.sum(h0 * att_dst, axis=1, keepdims=True)     # (N, 1)
    # Tiny (1,F)x(F,N) MXU op; runs once per call on a 16-node problem, so its
    # cost is negligible and it avoids a small-shape transpose lowering.
    a_src_row = jax.lax.dot_general(att_src, h0, (((1,), (1,)), ((), ())),
                                    preferred_element_type=jnp.float32)   # (1, N)

    row_ids = jax.lax.broadcasted_iota(jnp.int32, (N, N), 0)
    col_ids = jax.lax.broadcasted_iota(jnp.int32, (N, N), 1)
    not_diag = row_ids != col_ids
    mask = jnp.logical_and(adjT != 0.0, not_diag)                # edge j->i at [i, j]
    maskf = mask.astype(jnp.float32)

    # add_self_loops(fill_value='mean'): self-loop attr = mean of incoming
    # (non-self) edge attrs; 0 if the node has no incoming edges.
    deg = jnp.sum(maskf, axis=1, keepdims=True)                  # (N, 1)
    attr_sum = jnp.sum(maskf * adjT, axis=1, keepdims=True)      # (N, 1)
    loop_attr = jnp.where(deg > 0.0, attr_sum / jnp.maximum(deg, 1.0), 0.0)

    def leaky(v):
        return jnp.where(v >= 0.0, v, 0.2 * v)

    logits = leaky(a_dst_col + a_src_row + c_edge * adjT)        # (N, N)
    logits_self = leaky(a_src_col + a_dst_col + c_edge * loop_attr)  # (N, 1)

    neg = jnp.float32(-1e30)
    logits_m = jnp.where(mask, logits, neg)
    m = jnp.maximum(jnp.max(logits_m, axis=1, keepdims=True), logits_self)  # (N, 1)

    e = jnp.exp(logits_m - m)                                    # (N, N), 0 where masked
    e_self = jnp.exp(logits_self - m)                            # (N, 1)

    # Each real edge appears S times in its softmax group; the self-loop once.
    den = S * jnp.sum(e, axis=1, keepdims=True) + e_self         # (N, 1)
    num = S * jnp.dot(e, h0, preferred_element_type=jnp.float32) + e_self * h0
    # Exact divide kept (vs approx reciprocal) for parity with the PyTorch module;
    # this kernel runs once on a 16-row problem so it is not on the hot path.
    out_ref[...] = (num / den + bias_ref[...]).astype(out_ref.dtype)


# ----------------------------------------------------------------------------
# Wrapper
# ----------------------------------------------------------------------------
def _pick_pack(d, total_rows):
    """Pack P node-rows per packed row so the contraction dim is ~128 lanes."""
    P = 128 // d if (d <= 128 and 128 % d == 0) else 1
    while P > 1 and total_rows % P != 0:
        P //= 2
    return max(P, 1)


def _pick_tile(rows_p, max_tile=512):
    """Largest row tile (<= max_tile packed rows) that evenly divides rows_p."""
    if rows_p <= max_tile:
        return rows_p
    for t in range(max_tile, 7, -8):        # multiples of 8 (f32 sublane tiling)
        if rows_p % t == 0:
            return t
    return rows_p                           # fallback: single block


def gat_layer_forward(data, adj, params):
    """data: (B, T, N, d) float32; adj: (N, N) dense edge-weight matrix."""
    B, T, N, d = data.shape
    F = params["W"].shape[1]
    S = B * T
    total = S * N

    x_flat = data.reshape(total, d).astype(jnp.float32)
    adjT = adj.T.astype(jnp.float32)
    W = params["W"].astype(jnp.float32)
    bias = params["bias"].astype(jnp.float32)

    # ---- lane-dense packing: P nodes per packed row, block-diagonal W --------
    P = _pick_pack(d, total)
    rows_p = total // P
    x_packed = x_flat.reshape(rows_p, P * d)                     # 128-lane DMA rows
    Wp = jnp.kron(jnp.eye(P, dtype=jnp.float32), W)              # (P*d, P*F) block-diag
    bias_p = jnp.tile(bias, (1, P))                              # (1, P*F)

    TMp = _pick_tile(rows_p)
    grid = (rows_p // TMp,)

    out_packed = pl.pallas_call(
        _gemm_kernel,
        out_shape=jax.ShapeDtypeStruct((rows_p, P * F), jnp.float32),
        grid_spec=pltpu.PrefetchScalarGridSpec(
            num_scalar_prefetch=0,
            grid=grid,
            in_specs=[
                pl.BlockSpec((TMp, P * d), lambda i: (i, 0)),    # streamed, pipelined
                pl.BlockSpec((P * d, P * F), lambda i: (0, 0)),  # resident weight
                pl.BlockSpec((1, P * F), lambda i: (0, 0)),      # resident bias
            ],
            out_specs=pl.BlockSpec((TMp, P * F), lambda i: (i, 0)),
        ),
        compiler_params=pltpu.CompilerParams(
            dimension_semantics=("parallel",),                   # v7x: split rows across TCs
            vmem_limit_bytes=32 * 1024 * 1024,                   # sized for v7x VMEM too
        ),
    )(x_packed, Wp, bias_p)

    out_all = out_packed.reshape(total, F)

    # ---- attention-corrected first N rows (tiny, runs once) -----------------
    attn = functools.partial(_attn_kernel, n_nodes=N, n_copies=S)
    out0 = pl.pallas_call(
        attn,
        out_shape=jax.ShapeDtypeStruct((N, F), jnp.float32),
        in_specs=[pl.BlockSpec(memory_space=pltpu.MemorySpace.VMEM)] * 8,
        out_specs=pl.BlockSpec(memory_space=pltpu.MemorySpace.VMEM),
    )(x_flat[0:N], adjT, W,
      params["att_src"].astype(jnp.float32),
      params["att_dst"].astype(jnp.float32),
      params["w_edge"].astype(jnp.float32),
      params["att_edge"].astype(jnp.float32),
      bias)

    out_all = jax.lax.dynamic_update_slice(out_all, out0, (0, 0))
    return out_all.reshape(B, T, N, F)


def init_params(key, in_features, out_features):
    ks = jax.random.split(key, 5)

    def glorot(k, shape):
        fan_in, fan_out = shape[0], shape[-1]
        lim = (6.0 / (fan_in + fan_out)) ** 0.5
        return jax.random.uniform(k, shape, jnp.float32, -lim, lim)

    return {
        "W": glorot(ks[0], (in_features, out_features)),        # shared lin (src==dst)
        "att_src": glorot(ks[1], (1, out_features)),
        "att_dst": glorot(ks[2], (1, out_features)),
        "w_edge": glorot(ks[3], (1, out_features)),             # lin_edge (edge_dim=1)
        "att_edge": glorot(ks[4], (1, out_features)),
        "bias": jnp.zeros((1, out_features), jnp.float32),
    }


if __name__ == "__main__":
    B, T, N, d, F = 2, 4, 16, 8, 32
    key = jax.random.PRNGKey(0)
    kd, ka1, ka2, kp = jax.random.split(key, 4)

    data = jax.random.normal(kd, (B, T, N, d), jnp.float32)
    conn = jax.random.uniform(ka1, (N, N)) > 0.5
    weights = jax.random.uniform(ka2, (N, N), jnp.float32, minval=0.1, maxval=1.0)
    adj = jnp.where(conn, weights, 0.0)                          # dense weighted adjacency

    params = init_params(kp, d, F)

    fwd = jax.jit(gat_layer_forward)
    out = jax.block_until_ready(fwd(data, adj, params))

    assert out.shape == (B, T, N, F), out.shape
    assert bool(jnp.all(jnp.isfinite(out)))

    # Light sanity check of the packed GEMM path: rows >= N are pure x @ W + bias.
    x_flat = data.reshape(B * T * N, d)
    ref_rest = jnp.dot(x_flat[N:], params["W"],
                       precision=jax.lax.Precision.HIGHEST) + params["bias"]
    got_rest = out.reshape(B * T * N, F)[N:]
    assert bool(jnp.allclose(got_rest, ref_rest, rtol=1e-2, atol=1e-2))

    print("KERNEL_OK")
</pallas_src>

<mosaic_0001>
module attributes {stable_mosaic.version = 11 : i64} {
  func.func @_gemm_kernel(%arg0: i32, %arg1: memref<8x128xf32, #tpu.memory_space<vmem>>, %arg2: memref<128x512xf32, #tpu.memory_space<vmem>>, %arg3: memref<1x512xf32, #tpu.memory_space<vmem>>, %arg4: memref<8x512xf32, #tpu.memory_space<vmem>>) attributes {dimension_semantics = [#tpu.dimension_semantics<parallel>], iteration_bounds = array<i64: 1>, scalar_prefetch = 0 : i64, scratch_operands = 0 : i64, tpu.core_type = #tpu.core_type<tc>, window_params = [{transform_indices = @transform_0, window_bounds = array<i64: 8, 128>}, {pipeline_mode = #tpu.pipeline_mode<synchronous>, transform_indices = @transform_1, window_bounds = array<i64: 128, 512>}, {pipeline_mode = #tpu.pipeline_mode<synchronous>, transform_indices = @transform_2, window_bounds = array<i64: 1, 512>}, {transform_indices = @transform_3, window_bounds = array<i64: 8, 512>}]} {
    %c0 = arith.constant 0 : index
    %c0_0 = arith.constant 0 : index
    %0 = vector.load %arg1[%c0, %c0_0] : memref<8x128xf32, #tpu.memory_space<vmem>>, vector<8x128xf32>
    %c0_1 = arith.constant 0 : index
    %c0_2 = arith.constant 0 : index
    %1 = vector.load %arg2[%c0_1, %c0_2] : memref<128x512xf32, #tpu.memory_space<vmem>>, vector<128x512xf32>
    %cst = arith.constant dense<0.000000e+00> : vector<8x512xf32>
    %2 = tpu.matmul %0, %1, %cst {dimension_numbers = #tpu.dot_dimension_numbers<[1], [0], [0], [1], [0, 0, 1, 1], [], []>} : vector<8x128xf32>, vector<128x512xf32>, vector<8x512xf32> -> vector<8x512xf32>
    %c0_3 = arith.constant 0 : index
    %c0_4 = arith.constant 0 : index
    %3 = vector.load %arg3[%c0_3, %c0_4] : memref<1x512xf32, #tpu.memory_space<vmem>>, vector<1x512xf32>
    %4 = vector.broadcast %3 : vector<1x512xf32> to vector<8x512xf32>
    %5 = arith.addf %2, %4 : vector<8x512xf32>
    %c0_5 = arith.constant 0 : index
    %c0_6 = arith.constant 0 : index
    %6 = vector.load %arg4[%c0_5, %c0_6] : memref<8x512xf32, #tpu.memory_space<vmem>>, vector<8x512xf32>
    tpu.vector_store %arg4[%c0_5, %c0_6], %5 {strides = array<i32>} : memref<8x512xf32, #tpu.memory_space<vmem>>, vector<8x512xf32>,
    return
  }
  func.func @transform_0(%arg0: i32) -> (i32, i32) {
    %c0_i32 = arith.constant 0 : i32
    %c0_i32_0 = arith.constant 0 : i32
    return %arg0, %c0_i32 : i32, i32
  }
  func.func @transform_1(%arg0: i32) -> (i32, i32) {
    %c0_i32 = arith.constant 0 : i32
    %c0_i32_0 = arith.constant 0 : i32
    %c0_i32_1 = arith.constant 0 : i32
    return %c0_i32, %c0_i32_0 : i32, i32
  }
  func.func @transform_2(%arg0: i32) -> (i32, i32) {
    %c0_i32 = arith.constant 0 : i32
    %c0_i32_0 = arith.constant 0 : i32
    %c0_i32_1 = arith.constant 0 : i32
    return %c0_i32, %c0_i32_0 : i32, i32
  }
  func.func @transform_3(%arg0: i32) -> (i32, i32) {
    %c0_i32 = arith.constant 0 : i32
    %c0_i32_0 = arith.constant 0 : i32
    return %arg0, %c0_i32 : i32, i32
  }
}

module attributes {stable_mosaic.version = 11 : i64} {
  func.func @_attn_kernel(%arg0: memref<16x8xf32, #tpu.memory_space<vmem>>, %arg1: memref<16x16xf32, #tpu.memory_space<vmem>>, %arg2: memref<8x32xf32, #tpu.memory_space<vmem>>, %arg3: memref<1x32xf32, #tpu.memory_space<vmem>>, %arg4: memref<1x32xf32, #tpu.memory_space<vmem>>, %arg5: memref<1x32xf32, #tpu.memory_space<vmem>>, %arg6: memref<1x32xf32, #tpu.memory_space<vmem>>, %arg7: memref<1x32xf32, #tpu.memory_space<vmem>>, %arg8: memref<16x32xf32, #tpu.memory_space<vmem>>) attributes {dimension_semantics = [], scalar_prefetch = 0 : i64, scratch_operands = 0 : i64, tpu.core_type = #tpu.core_type<tc>} {
    %c0 = arith.constant 0 : index
    %c0_0 = arith.constant 0 : index
    %0 = vector.load %arg0[%c0, %c0_0] : memref<16x8xf32, #tpu.memory_space<vmem>>, vector<16x8xf32>
    %c0_1 = arith.constant 0 : index
    %c0_2 = arith.constant 0 : index
    %1 = vector.load %arg2[%c0_1, %c0_2] : memref<8x32xf32, #tpu.memory_space<vmem>>, vector<8x32xf32>
    %cst = arith.constant dense<0.000000e+00> : vector<16x32xf32>
    %2 = tpu.matmul %0, %1, %cst {dimension_numbers = #tpu.dot_dimension_numbers<[1], [0], [0], [1], [0, 0, 1, 1], [], []>} : vector<16x8xf32>, vector<8x32xf32>, vector<16x32xf32> -> vector<16x32xf32>
    %c0_3 = arith.constant 0 : index
    %c0_4 = arith.constant 0 : index
    %3 = vector.load %arg1[%c0_3, %c0_4] : memref<16x16xf32, #tpu.memory_space<vmem>>, vector<16x16xf32>
    %c0_5 = arith.constant 0 : index
    %c0_6 = arith.constant 0 : index
    %4 = vector.load %arg3[%c0_5, %c0_6] : memref<1x32xf32, #tpu.memory_space<vmem>>, vector<1x32xf32>
    %c0_7 = arith.constant 0 : index
    %c0_8 = arith.constant 0 : index
    %5 = vector.load %arg4[%c0_7, %c0_8] : memref<1x32xf32, #tpu.memory_space<vmem>>, vector<1x32xf32>
    %c0_9 = arith.constant 0 : index
    %c0_10 = arith.constant 0 : index
    %6 = vector.load %arg5[%c0_9, %c0_10] : memref<1x32xf32, #tpu.memory_space<vmem>>, vector<1x32xf32>
    %c0_11 = arith.constant 0 : index
    %c0_12 = arith.constant 0 : index
    %7 = vector.load %arg6[%c0_11, %c0_12] : memref<1x32xf32, #tpu.memory_space<vmem>>, vector<1x32xf32>
    %8 = arith.mulf %6, %7 : vector<1x32xf32>
    %9 = vector.shape_cast %8 : vector<1x32xf32> to vector<1x1x32xf32>
    %cst_13 = arith.constant dense<0.000000e+00> : vector<1xf32>
    %10 = vector.multi_reduction <add>, %9, %cst_13 [1, 2] : vector<1x1x32xf32> to vector<1xf32>
    %11 = vector.shape_cast %10 : vector<1xf32> to vector<1x1x1xf32>
    %12 = vector.extract %11[0, 0, 0] : f32 from vector<1x1x1xf32>
    %13 = vector.broadcast %12 : f32 to vector<1x1xf32>
    %14 = vector.broadcast %4 : vector<1x32xf32> to vector<16x32xf32>
    %15 = arith.mulf %2, %14 : vector<16x32xf32>
    %cst_14 = arith.constant dense<0.000000e+00> : vector<16xf32>
    %16 = vector.multi_reduction <add>, %15, %cst_14 [1] : vector<16x32xf32> to vector<16xf32>
    %17 = vector.shape_cast %16 : vector<16xf32> to vector<16x1xf32>
    %18 = vector.broadcast %5 : vector<1x32xf32> to vector<16x32xf32>
    %19 = arith.mulf %2, %18 : vector<16x32xf32>
    %cst_15 = arith.constant dense<0.000000e+00> : vector<16xf32>
    %20 = vector.multi_reduction <add>, %19, %cst_15 [1] : vector<16x32xf32> to vector<16xf32>
    %21 = vector.shape_cast %20 : vector<16xf32> to vector<16x1xf32>
    %cst_16 = arith.constant dense<0.000000e+00> : vector<1x16xf32>
    %22 = tpu.matmul %4, %2, %cst_16 {dimension_numbers = #tpu.dot_dimension_numbers<[1], [1], [0], [0], [0, 0, 1, 0], [], []>} : vector<1x32xf32>, vector<16x32xf32>, vector<1x16xf32> -> vector<1x16xf32>
    %23 = tpu.iota {dimensions = array<i32: 0>} : vector<16x16xi32>
    %24 = tpu.iota {dimensions = array<i32: 1>} : vector<16x16xi32>
    %25 = arith.cmpi ne, %23, %24 : vector<16x16xi32>
    %cst_17 = arith.constant 0.000000e+00 : f32
    %26 = vector.broadcast %cst_17 : f32 to vector<16x16xf32>
    %27 = arith.cmpf one, %3, %26 : vector<16x16xf32>
    %28 = arith.andi %27, %25 : vector<16x16xi1>
    %29 = arith.extui %28 : vector<16x16xi1> to vector<16x16xi32>
    %30 = arith.sitofp %29 : vector<16x16xi32> to vector<16x16xf32>
    %cst_18 = arith.constant dense<0.000000e+00> : vector<16xf32>
    %31 = vector.multi_reduction <add>, %30, %cst_18 [1] : vector<16x16xf32> to vector<16xf32>
    %32 = vector.shape_cast %31 : vector<16xf32> to vector<16x1xf32>
    %33 = arith.mulf %30, %3 : vector<16x16xf32>
    %cst_19 = arith.constant dense<0.000000e+00> : vector<16xf32>
    %34 = vector.multi_reduction <add>, %33, %cst_19 [1] : vector<16x16xf32> to vector<16xf32>
    %35 = vector.shape_cast %34 : vector<16xf32> to vector<16x1xf32>
    %cst_20 = arith.constant 0.000000e+00 : f32
    %36 = vector.broadcast %cst_20 : f32 to vector<16x1xf32>
    %37 = arith.cmpf ogt, %32, %36 : vector<16x1xf32>
    %cst_21 = arith.constant 1.000000e+00 : f32
    %38 = vector.broadcast %cst_21 : f32 to vector<16x1xf32>
    %39 = arith.maximumf %32, %38 : vector<16x1xf32>
    %40 = arith.divf %35, %39 : vector<16x1xf32>
    %cst_22 = arith.constant 0.000000e+00 : f32
    %41 = vector.broadcast %cst_22 : f32 to vector<16x1xf32>
    %42 = arith.select %37, %40, %41 : vector<16x1xi1>, vector<16x1xf32>
    %43 = vector.broadcast %21 : vector<16x1xf32> to vector<16x16xf32>
    %44 = vector.broadcast %22 : vector<1x16xf32> to vector<16x16xf32>
    %45 = arith.addf %43, %44 : vector<16x16xf32>
    %46 = vector.broadcast %13 : vector<1x1xf32> to vector<16x16xf32>
    %47 = arith.mulf %46, %3 : vector<16x16xf32>
    %48 = arith.addf %45, %47 : vector<16x16xf32>
    %cst_23 = arith.constant 0.000000e+00 : f32
    %49 = vector.broadcast %cst_23 : f32 to vector<16x16xf32>
    %50 = arith.cmpf oge, %48, %49 : vector<16x16xf32>
    %cst_24 = arith.constant 2.000000e-01 : f32
    %51 = vector.broadcast %cst_24 : f32 to vector<16x16xf32>
    %52 = arith.mulf %51, %48 : vector<16x16xf32>
    %53 = arith.select %50, %48, %52 : vector<16x16xi1>, vector<16x16xf32>
    %54 = arith.addf %17, %21 : vector<16x1xf32>
    %55 = vector.broadcast %13 : vector<1x1xf32> to vector<16x1xf32>
    %56 = arith.mulf %55, %42 : vector<16x1xf32>
    %57 = arith.addf %54, %56 : vector<16x1xf32>
    %cst_25 = arith.constant 0.000000e+00 : f32
    %58 = vector.broadcast %cst_25 : f32 to vector<16x1xf32>
    %59 = arith.cmpf oge, %57, %58 : vector<16x1xf32>
    %cst_26 = arith.constant 2.000000e-01 : f32
    %60 = vector.broadcast %cst_26 : f32 to vector<16x1xf32>
    %61 = arith.mulf %60, %57 : vector<16x1xf32>
    %62 = arith.select %59, %57, %61 : vector<16x1xi1>, vector<16x1xf32>
    %cst_27 = arith.constant -1.000000e+30 : f32
    %63 = vector.broadcast %cst_27 : f32 to vector<16x16xf32>
    %64 = arith.select %28, %53, %63 : vector<16x16xi1>, vector<16x16xf32>
    %cst_28 = arith.constant dense<0xFF800000> : vector<16xf32>
    %65 = vector.multi_reduction <maximumf>, %64, %cst_28 [1] : vector<16x16xf32> to vector<16xf32>
    %66 = vector.shape_cast %65 : vector<16xf32> to vector<16x1xf32>
    %67 = arith.maximumf %66, %62 : vector<16x1xf32>
    %68 = vector.broadcast %67 : vector<16x1xf32> to vector<16x16xf32>
    %69 = arith.subf %64, %68 : vector<16x16xf32>
    %70 = math.exp %69 : vector<16x16xf32>
    %71 = arith.subf %62, %67 : vector<16x1xf32>
    %72 = math.exp %71 : vector<16x1xf32>
    %cst_29 = arith.constant dense<0.000000e+00> : vector<16xf32>
    %73 = vector.multi_reduction <add>, %70, %cst_29 [1] : vector<16x16xf32> to vector<16xf32>
    %74 = vector.shape_cast %73 : vector<16xf32> to vector<16x1xf32>
    %cst_30 = arith.constant 8.000000e+00 : f32
    %75 = vector.broadcast %cst_30 : f32 to vector<16x1xf32>
    %76 = arith.mulf %75, %74 : vector<16x1xf32>
    %77 = arith.addf %76, %72 : vector<16x1xf32>
    %cst_31 = arith.constant dense<0.000000e+00> : vector<16x32xf32>
    %78 = tpu.matmul %70, %2, %cst_31 {dimension_numbers = #tpu.dot_dimension_numbers<[1], [0], [0], [1], [0, 0, 1, 1], [], []>} : vector<16x16xf32>, vector<16x32xf32>, vector<16x32xf32> -> vector<16x32xf32>
    %cst_32 = arith.constant 8.000000e+00 : f32
    %79 = vector.broadcast %cst_32 : f32 to vector<16x32xf32>
    %80 = arith.mulf %79, %78 : vector<16x32xf32>
    %81 = vector.broadcast %72 : vector<16x1xf32> to vector<16x32xf32>
    %82 = arith.mulf %81, %2 : vector<16x32xf32>
    %83 = arith.addf %80, %82 : vector<16x32xf32>
    %84 = vector.broadcast %77 : vector<16x1xf32> to vector<16x32xf32>
    %85 = arith.divf %83, %84 : vector<16x32xf32>
    %c0_33 = arith.constant 0 : index
    %c0_34 = arith.constant 0 : index
    %86 = vector.load %arg7[%c0_33, %c0_34] : memref<1x32xf32, #tpu.memory_space<vmem>>, vector<1x32xf32>
    %87 = vector.broadcast %86 : vector<1x32xf32> to vector<16x32xf32>
    %88 = arith.addf %85, %87 : vector<16x32xf32>
    %c0_35 = arith.constant 0 : index
    %c0_36 = arith.constant 0 : index
    %89 = vector.load %arg8[%c0_35, %c0_36] : memref<16x32xf32, #tpu.memory_space<vmem>>, vector<16x32xf32>
    tpu.vector_store %arg8[%c0_35, %c0_36], %88 {strides = array<i32>} : memref<16x32xf32, #tpu.memory_space<vmem>>, vector<16x32xf32>,
    return
  }
}

</mosaic_0001>

<llo_original>
// kernel: gat_layer_forward.3
$region0: #{gat_layer_forward.3}
  #allocation0 [shape = 'u32[]', space=smem, size = 0x4, offset = 0x4, fixed_abs, tag = 'smem constant byte address 0x4 - core index']
  #allocation1 [shape = 'u32[144,128]{1,0:T(1,128)}', space=vmem, size = 0x12000, scoped, tag = 'internal scratch']
  %s0 = inlined_call_operand.vmem [shape: f32[16,8], index: 0, kind: input, shape index: {}]
  %s1 = inlined_call_operand.vmem [shape: f32[16,16], index: 1, kind: input, shape index: {}]
  %s2 = inlined_call_operand.vmem [shape: f32[8,32], index: 2, kind: input, shape index: {}]
  %s3 = inlined_call_operand.vmem [shape: f32[1,32], index: 3, kind: input, shape index: {}]
  %s4 = inlined_call_operand.vmem [shape: f32[1,32], index: 4, kind: input, shape index: {}]
  %s5 = inlined_call_operand.vmem [shape: f32[1,32], index: 5, kind: input, shape index: {}]
  %s6 = inlined_call_operand.vmem [shape: f32[1,32], index: 6, kind: input, shape index: {}]
  %s7 = inlined_call_operand.vmem [shape: f32[1,32], index: 7, kind: input, shape index: {}]
  %s8 = inlined_call_operand.vmem [shape: f32[16,32], index: 8, kind: output, shape index: {}]
  %s9 = sld [smem:[#allocation0]]
  $region42: #{gat_layer_forward.3} parent=0
    _
  %s11 = ssub.s32 1, %s9
  %s12 = scalar_select 0, %s11, %s9
  // Predicated region
  $region2: #{gat_layer_forward.3} parent=0 // pred_check
    _
  $region3: #{gat_layer_forward.3} parent=0 // pred_check_branch
    %14 = sbr.rel (0) target = $region5
  $region4: #{gat_layer_forward.3} parent=0 // pred_region
    _
  $region5: #{gat_layer_forward.3} parent=0 // pred_fallthru
    _
  // Predicated region
  $region6: #{gat_layer_forward.3} parent=0 // pred_check
    _
  $region7: #{gat_layer_forward.3} parent=0 // pred_check_branch
    %16 = sbr.rel (0) target = $region9
  $region8: #{gat_layer_forward.3} parent=0 // pred_region
    _
  $region9: #{gat_layer_forward.3} parent=0 // pred_fallthru
    _
  // Predicated region
  $region10: #{gat_layer_forward.3} parent=0 // pred_check
    _
  $region11: #{gat_layer_forward.3} parent=0 // pred_check_branch
    %18 = sbr.rel (0) target = $region13
  $region12: #{gat_layer_forward.3} parent=0 // pred_region
    _
  $region13: #{gat_layer_forward.3} parent=0 // pred_fallthru
    _
  // Predicated region
  $region14: #{gat_layer_forward.3} parent=0 // pred_check
    _
  $region15: #{gat_layer_forward.3} parent=0 // pred_check_branch
    %20 = sbr.rel (0) target = $region17
  $region16: #{gat_layer_forward.3} parent=0 // pred_region
    _
  $region17: #{gat_layer_forward.3} parent=0 // pred_fallthru
    _
  // Predicated region
  $region18: #{gat_layer_forward.3} parent=0 // pred_check
    _
  $region19: #{gat_layer_forward.3} parent=0 // pred_check_branch
    %22 = sbr.rel (0) target = $region21
  $region20: #{gat_layer_forward.3} parent=0 // pred_region
    _
  $region21: #{gat_layer_forward.3} parent=0 // pred_fallthru
    _
  // Predicated region
  $region22: #{gat_layer_forward.3} parent=0 // pred_check
    _
  $region23: #{gat_layer_forward.3} parent=0 // pred_check_branch
    %24 = sbr.rel (0) target = $region25
  $region24: #{gat_layer_forward.3} parent=0 // pred_region
    _
  $region25: #{gat_layer_forward.3} parent=0 // pred_fallthru
    _
  // Predicated region
  $region26: #{gat_layer_forward.3} parent=0 // pred_check
    _
  $region27: #{gat_layer_forward.3} parent=0 // pred_check_branch
    %26 = sbr.rel (0) target = $region29
  $region28: #{gat_layer_forward.3} parent=0 // pred_region
    _
  $region29: #{gat_layer_forward.3} parent=0 // pred_fallthru
    _
  // Predicated region
  $region30: #{gat_layer_forward.3} parent=0 // pred_check
    _
  $region31: #{gat_layer_forward.3} parent=0 // pred_check_branch
    %28 = sbr.rel (0) target = $region33
  $region32: #{gat_layer_forward.3} parent=0 // pred_region
    _
  $region33: #{gat_layer_forward.3} parent=0 // pred_fallthru
    _
  %v29 = vld [vmem:[%s0] sm:$0xff]
  %v30 = vld [vmem:[%s0 + $0x8] sm:$0xff]
  %v31 = vld [vmem:[%s2] sm:$0xff]
  %vm32 = vcmask 64512
  %v34 = vsel %vm32, %v29, 0
  %v37 = vsel %vm32, %v30, 0
  %39 = vmatprep.subr.mxu0 0.0
  %40 = vmatpush1.msra.mxu0 %v31
  %41 = vmatprep.subr.mxu0 0.0
  %42 = vmatpush1.msra.mxu0 0.0
  %43 = vmatprep.subr.mxu0 0.0
  %44 = vmatpush1.msra.mxu0 0.0
  %45 = vmatprep.subr.mxu0 0.0
  %46 = vmatpush1.msra.mxu0 0.0
  %47 = vmatprep.subr.mxu0 0.0
  %48 = vmatpush1.msra.mxu0 0.0
  %49 = vmatprep.subr.mxu0 0.0
  %50 = vmatpush1.msra.mxu0 0.0
  %51 = vmatprep.subr.mxu0 0.0
  %52 = vmatpush1.msra.mxu0 0.0
  %53 = vmatprep.subr.mxu0 0.0
  %54 = vmatpush1.msra.mxu0 0.0
  %55 = vmatprep.subr.mxu0 0.0
  %56 = vmatpush1.msra.mxu0 0.0
  %57 = vmatprep.subr.mxu0 0.0
  %58 = vmatpush1.msra.mxu0 0.0
  %59 = vmatprep.subr.mxu0 0.0
  %60 = vmatpush1.msra.mxu0 0.0
  %61 = vmatprep.subr.mxu0 0.0
  %62 = vmatpush1.msra.mxu0 0.0
  %63 = vmatprep.subr.mxu0 0.0
  %64 = vmatpush1.msra.mxu0 0.0
  %65 = vmatprep.subr.mxu0 0.0
  %66 = vmatpush1.msra.mxu0 0.0
  %67 = vmatprep.subr.mxu0 0.0
  %68 = vmatpush1.msra.mxu0 0.0
  %69 = vmatprep.subr.mxu0 0.0
  %70 = vmatpush1.msra.mxu0 0.0
  %71 = vmatprep.subr.mxu0 0.0
  %72 = vmatpush1.msra.mxu0 0.0
  %73 = vmatprep.subr.mxu0 0.0
  %74 = vmatpush1.msra.mxu0 0.0
  %75 = vmatprep.subr.mxu0 0.0
  %76 = vmatpush1.msra.mxu0 0.0
  %77 = vmatprep.subr.mxu0 0.0
  %78 = vmatpush1.msra.mxu0 0.0
  %79 = vmatprep.subr.mxu0 0.0
  %80 = vmatpush1.msra.mxu0 0.0
  %81 = vmatprep.subr.mxu0 0.0
  %82 = vmatpush1.msra.mxu0 0.0
  %83 = vmatprep.subr.mxu0 0.0
  %84 = vmatpush1.msra.mxu0 0.0
  %85 = vmatprep.subr.mxu0 0.0
  %86 = vmatpush1.msra.mxu0 0.0
  %87 = vmatprep.subr.mxu0 0.0
  %88 = vmatpush1.msra.mxu0 0.0
  %89 = vmatprep.subr.mxu0 0.0
  %90 = vmatpush1.msra.mxu0 0.0
  %91 = vmatprep.subr.mxu0 0.0
  %92 = vmatpush1.msra.mxu0 0.0
  %93 = vmatprep.subr.mxu0 0.0
  %94 = vmatpush1.msra.mxu0 0.0
  %95 = vmatprep.subr.mxu0 0.0
  %96 = vmatpush1.msra.mxu0 0.0
  %97 = vmatprep.subr.mxu0 0.0
  %98 = vmatpush1.msra.mxu0 0.0
  %99 = vmatprep.subr.mxu0 0.0
  %100 = vmatpush1.msra.mxu0 0.0
  %101 = vmatprep.subr.mxu0 0.0
  %102 = vmatpush1.msra.mxu0 0.0
  %103 = vmatprep.mubr.f32.mxu0 0.0
  %104 = vmatmul.mubr.f32.gmra.mrb[0].mxu0 %v34
  %v105 = vpop.f32.mrb[0].mxu0
  %v106 = vadd.f32 0.0, %v105
  %v107 = vpop.f32.mrb[0].mxu0
  %108 = vmatprep.mubr.f32.mxu0 0.0
  %109 = vmatmul.mubr.f32.gmra.mrb[0].mxu0 %v37
  %v110 = vpop.f32.mrb[0].mxu0
  %v111 = vadd.f32 0.0, %v110
  %v112 = vpop.f32.mrb[0].mxu0
  %113 = vdwg.mxu0
  %v114 = vld [vmem:[%s1] sm:$0xff]
  %v115 = vld [vmem:[%s1 + $0x8] sm:$0xff]
  %v116 = vld [vmem:[%s3] sm:$0x1]
  %v117 = vld [vmem:[%s4] sm:$0x1]
  %v118 = vld [vmem:[%s5] sm:$0x1]
  %v119 = vld [vmem:[%s6] sm:$0x1]
  %v120 = vmul.f32 %v118, %v119
  %vm121 = vcmask 253952
  %v122 = vsel %vm121, %v120, 0.0
  %123 = vadd.xlane.f32.xlu0 %v122
  %v124 = vpop.xlane.xlu0 %123
  %v125 = vrot.slane %v124, 4
  %v126 = vadd.f32 %v124, %v125
  %v127 = vrot.slane %v126, 2
  %v128 = vadd.f32 %v126, %v127
  %v129 = vrot.slane %v128, 1
  %v130 = vadd.f32 %v128, %v129
  %s131 = vtos %v130
  %v133 = vlaneseq
  %v134 = vshrl.u32 %v133, 7
  %v135 = vsub.s32 0, %v134
  %v136 = vrot.slane %v116, %v135
  %v138 = vmul.f32 %v106, %v136
  %v139 = vmul.f32 %v111, %v136
  %vm140 = vcmask 261120
  %v141 = vsel %vm140, %v138, 0.0
  %142 = vadd.xlane.f32.xlu0 %v141
  %v143 = vpop.xlane.xlu0 %142
  %v144 = vsel %vm140, %v139, 0.0
  %145 = vadd.xlane.f32.xlu0 %v144
  %v146 = vpop.xlane.xlu0 %145
  %v148 = vlaneseq
  %v149 = vshrl.u32 %v148, 7
  %v150 = vsub.s32 0, %v149
  %v151 = vrot.slane %v117, %v150
  %v153 = vmul.f32 %v106, %v151
  %v154 = vmul.f32 %v111, %v151
  %v155 = vsel %vm140, %v153, 0.0
  %156 = vadd.xlane.f32.xlu0 %v155
  %v157 = vpop.xlane.xlu0 %156
  %v158 = vsel %vm140, %v154, 0.0
  %159 = vadd.xlane.f32.xlu0 %v158
  %v160 = vpop.xlane.xlu0 %159
  %v161 = vsel %vm140, %v116, 0
  %v164 = vsel %vm140, %v106, 0
  %v167 = vsel %vm140, %v111, 0
  %169 = vmatprep.subr.mxu0 0.0
  %170 = vmatpush1.xpose.msra.mxu0 %v164
  %171 = vmatprep.subr.mxu0 0.0
  %172 = vmatpush1.xpose.msra.mxu0 %v167
  %173 = vmatprep.subr.mxu0 0.0
  %174 = vmatpush1.xpose.msra.mxu0 0.0
  %175 = vmatprep.subr.mxu0 0.0
  %176 = vmatpush1.xpose.msra.mxu0 0.0
  %177 = vmatprep.subr.mxu0 0.0
  %178 = vmatpush1.xpose.msra.mxu0 0.0
  %179 = vmatprep.subr.mxu0 0.0
  %180 = vmatpush1.xpose.msra.mxu0 0.0
  %181 = vmatprep.subr.mxu0 0.0
  %182 = vmatpush1.xpose.msra.mxu0 0.0
  %183 = vmatprep.subr.mxu0 0.0
  %184 = vmatpush1.xpose.msra.mxu0 0.0
  %185 = vmatprep.subr.mxu0 0.0
  %186 = vmatpush1.xpose.msra.mxu0 0.0
  %187 = vmatprep.subr.mxu0 0.0
  %188 = vmatpush1.xpose.msra.mxu0 0.0
  %189 = vmatprep.subr.mxu0 0.0
  %190 = vmatpush1.xpose.msra.mxu0 0.0
  %191 = vmatprep.subr.mxu0 0.0
  %192 = vmatpush1.xpose.msra.mxu0 0.0
  %193 = vmatprep.subr.mxu0 0.0
  %194 = vmatpush1.xpose.msra.mxu0 0.0
  %195 = vmatprep.subr.mxu0 0.0
  %196 = vmatpush1.xpose.msra.mxu0 0.0
  %197 = vmatprep.subr.mxu0 0.0
  %198 = vmatpush1.xpose.msra.mxu0 0.0
  %199 = vmatprep.subr.mxu0 0.0
  %200 = vmatpush1.xpose.msra.mxu0 0.0
  %201 = vmatprep.subr.mxu0 0.0
  %202 = vmatpush1.xpose.msra.mxu0 0.0
  %203 = vmatprep.subr.mxu0 0.0
  %204 = vmatpush1.xpose.msra.mxu0 0.0
  %205 = vmatprep.subr.mxu0 0.0
  %206 = vmatpush1.xpose.msra.mxu0 0.0
  %207 = vmatprep.subr.mxu0 0.0
  %208 = vmatpush1.xpose.msra.mxu0 0.0
  %209 = vmatprep.subr.mxu0 0.0
  %210 = vmatpush1.xpose.msra.mxu0 0.0
  %211 = vmatprep.subr.mxu0 0.0
  %212 = vmatpush1.xpose.msra.mxu0 0.0
  %213 = vmatprep.subr.mxu0 0.0
  %214 = vmatpush1.xpose.msra.mxu0 0.0
  %215 = vmatprep.subr.mxu0 0.0
  %216 = vmatpush1.xpose.msra.mxu0 0.0
  %217 = vmatprep.subr.mxu0 0.0
  %218 = vmatpush1.xpose.msra.mxu0 0.0
  %219 = vmatprep.subr.mxu0 0.0
  %220 = vmatpush1.xpose.msra.mxu0 0.0
  %221 = vmatprep.subr.mxu0 0.0
  %222 = vmatpush1.xpose.msra.mxu0 0.0
  %223 = vmatprep.subr.mxu0 0.0
  %224 = vmatpush1.xpose.msra.mxu0 0.0
  %225 = vmatprep.subr.mxu0 0.0
  %226 = vmatpush1.xpose.msra.mxu0 0.0
  %227 = vmatprep.subr.mxu0 0.0
  %228 = vmatpush1.xpose.msra.mxu0 0.0
  %229 = vmatprep.subr.mxu0 0.0
  %230 = vmatpush1.xpose.msra.mxu0 0.0
  %231 = vmatprep.subr.mxu0 0.0
  %232 = vmatpush1.xpose.msra.mxu0 0.0
  %233 = vmatprep.mubr.f32.mxu0 0.0
  %234 = vmatmul.mubr.f32.gmra.mrb[0].mxu0 %v161
  %v235 = vpop.f32.mrb[0].mxu0
  %v236 = vadd.f32 0.0, %v235
  %v237 = vpop.f32.mrb[0].mxu0
  %238 = vdwg.mxu0
  %v239 = vlaneseq
  %v240 = vshrl.u32 %v239, 7
  %v241 = vadd.s32 %v240, 8
  %v242 = vlaneseq
  %v243 = vand.u32 %v242, 127
  %vm244 = vcmp.ne.s32.totalorder %v240, %v243
  %vm245 = vcmp.ne.s32.totalorder %v241, %v243
  %vm246 = vcmp.ne.f32.partialorder %v114, 0.0
  %vm247 = vcmp.ne.f32.partialorder %v115, 0.0
  %vm248 = vmand %vm246, %vm244
  %vm249 = vmand %vm247, %vm245
  %v250 = vsel %vm248, 1, 0
  %v251 = vsel %vm249, 1, 0
  %v252 = vcvt.s32.f32 %v250
  %v253 = vcvt.s32.f32 %v251
  %vm254 = vcmask 130048
  %v255 = vsel %vm254, %v252, 0.0
  %256 = vadd.xlane.f32.xlu0 %v255
  %v257 = vpop.xlane.xlu0 %256
  %v258 = vsel %vm254, %v253, 0.0
  %259 = vadd.xlane.f32.xlu0 %v258
  %v260 = vpop.xlane.xlu0 %259
  %v261 = vmul.f32 %v252, %v114
  %v262 = vmul.f32 %v253, %v115
  %v263 = vsel %vm254, %v261, 0.0
  %264 = vadd.xlane.f32.xlu0 %v263
  %v265 = vpop.xlane.xlu0 %264
  %v266 = vsel %vm254, %v262, 0.0
  %267 = vadd.xlane.f32.xlu0 %v266
  %v268 = vpop.xlane.xlu0 %267
  %vm269 = vcmp.gt.f32.partialorder %v257, 0.0
  %vm270 = vcmp.gt.f32.partialorder %v260, 0.0
  %v271 = vmax.f32 %v257, 1.0
  %v272 = vmax.f32 %v260, 1.0
  %v273 = vrcp.pop %v271
  %v274 = vmul.f32 %v265, %v273
  %v275 = vrcp.pop %v272
  %v276 = vmul.f32 %v268, %v275
  %v277 = vsel %vm269, %v274, 0.0
  %v278 = vsel %vm270, %v276, 0.0
  %v279 = vlaneseq
  %v280 = vshrl.u32 %v279, 7
  %v281 = vsub.s32 0, %v280
  %v282 = vrot.slane %v236, %v281
  %v283 = vadd.f32 %v157, %v282
  %v284 = vadd.f32 %v160, %v282
  %v285 = vstv %s131
  %v286 = vmul.f32 %v285, %v114
  %v287 = vmul.f32 %v285, %v115
  %v288 = vadd.f32 %v283, %v286
  %v289 = vadd.f32 %v284, %v287
  %vm290 = vcmp.ge.f32.partialorder %v288, 0.0
  %vm291 = vcmp.ge.f32.partialorder %v289, 0.0
  %v292 = vmul.f32 %v288, 0.2
  %v293 = vmul.f32 %v289, 0.2
  %v294 = vsel %vm290, %v288, %v292
  %v295 = vsel %vm291, %v289, %v293
  %v296 = vadd.f32 %v143, %v157
  %v297 = vadd.f32 %v146, %v160
  %v298 = vmul.f32 %v285, %v277
  %v299 = vmul.f32 %v285, %v278
  %v300 = vadd.f32 %v296, %v298
  %v301 = vadd.f32 %v297, %v299
  %vm302 = vcmp.ge.f32.partialorder %v300, 0.0
  %vm303 = vcmp.ge.f32.partialorder %v301, 0.0
  %v304 = vmul.f32 %v300, 0.2
  %v305 = vmul.f32 %v301, 0.2
  %v306 = vsel %vm302, %v300, %v304
  %v307 = vsel %vm303, %v301, %v305
  %v308 = vsel %vm248, %v294, -1e+30
  %v309 = vsel %vm249, %v295, -1e+30
  %v310 = vsel %vm254, %v308, -inf
  %311 = vmax.xlane.f32.xlu0 %v310
  %v312 = vpop.xlane.xlu0 %311
  %v313 = vsel %vm254, %v309, -inf
  %314 = vmax.xlane.f32.xlu0 %v313
  %v315 = vpop.xlane.xlu0 %314
  %v316 = vmax.f32 %v312, %v306
  %v317 = vmax.f32 %v315, %v307
  %v318 = vsub.f32 %v308, %v316
  %v319 = vsub.f32 %v309, %v317
  %v320 = vmul.f32 %v318, 1.442695
  %v321 = vpow.pop %v320
  %v322 = vmul.f32 %v319, 1.442695
  %v323 = vpow.pop %v322
  %v324 = vsub.f32 %v306, %v316
  %v325 = vsub.f32 %v307, %v317
  %v326 = vmul.f32 %v324, 1.442695
  %v327 = vpow.pop %v326
  %v328 = vmul.f32 %v325, 1.442695
  %v329 = vpow.pop %v328
  %v330 = vsel %vm254, %v321, 0.0
  %331 = vadd.xlane.f32.xlu0 %v330
  %v332 = vpop.xlane.xlu0 %331
  %v333 = vsel %vm254, %v323, 0.0
  %334 = vadd.xlane.f32.xlu0 %v333
  %v335 = vpop.xlane.xlu0 %334
  %v336 = vmul.f32 %v332, 8.0
  %v337 = vmul.f32 %v335, 8.0
  %v338 = vadd.f32 %v336, %v327
  %v339 = vadd.f32 %v337, %v329
  %v341 = vsel %vm254, %v321, 0
  %v344 = vsel %vm254, %v323, 0
  %346 = vmatprep.subr.mxu0 0.0
  %347 = vmatpush1.msra.mxu0 %v106
  %348 = vmatprep.subr.mxu0 0.0
  %349 = vmatpush1.msra.mxu0 %v111
  %350 = vmatprep.subr.mxu0 0.0
  %351 = vmatpush1.msra.mxu0 0.0
  %352 = vmatprep.subr.mxu0 0.0
  %353 = vmatpush1.msra.mxu0 0.0
  %354 = vmatprep.subr.mxu0 0.0
  %355 = vmatpush1.msra.mxu0 0.0
  %356 = vmatprep.subr.mxu0 0.0
  %357 = vmatpush1.msra.mxu0 0.0
  %358 = vmatprep.subr.mxu0 0.0
  %359 = vmatpush1.msra.mxu0 0.0
  %360 = vmatprep.subr.mxu0 0.0
  %361 = vmatpush1.msra.mxu0 0.0
  %362 = vmatprep.subr.mxu0 0.0
  %363 = vmatpush1.msra.mxu0 0.0
  %364 = vmatprep.subr.mxu0 0.0
  %365 = vmatpush1.msra.mxu0 0.0
  %366 = vmatprep.subr.mxu0 0.0
  %367 = vmatpush1.msra.mxu0 0.0
  %368 = vmatprep.subr.mxu0 0.0
  %369 = vmatpush1.msra.mxu0 0.0
  %370 = vmatprep.subr.mxu0 0.0
  %371 = vmatpush1.msra.mxu0 0.0
  %372 = vmatprep.subr.mxu0 0.0
  %373 = vmatpush1.msra.mxu0 0.0
  %374 = vmatprep.subr.mxu0 0.0
  %375 = vmatpush1.msra.mxu0 0.0
  %376 = vmatprep.subr.mxu0 0.0
  %377 = vmatpush1.msra.mxu0 0.0
  %378 = vmatprep.subr.mxu0 0.0
  %379 = vmatpush1.msra.mxu0 0.0
  %380 = vmatprep.subr.mxu0 0.0
  %381 = vmatpush1.msra.mxu0 0.0
  %382 = vmatprep.subr.mxu0 0.0
  %383 = vmatpush1.msra.mxu0 0.0
  %384 = vmatprep.subr.mxu0 0.0
  %385 = vmatpush1.msra.mxu0 0.0
  %386 = vmatprep.subr.mxu0 0.0
  %387 = vmatpush1.msra.mxu0 0.0
  %388 = vmatprep.subr.mxu0 0.0
  %389 = vmatpush1.msra.mxu0 0.0
  %390 = vmatprep.subr.mxu0 0.0
  %391 = vmatpush1.msra.mxu0 0.0
  %392 = vmatprep.subr.mxu0 0.0
  %393 = vmatpush1.msra.mxu0 0.0
  %394 = vmatprep.subr.mxu0 0.0
  %395 = vmatpush1.msra.mxu0 0.0
  %396 = vmatprep.subr.mxu0 0.0
  %397 = vmatpush1.msra.mxu0 0.0
  %398 = vmatprep.subr.mxu0 0.0
  %399 = vmatpush1.msra.mxu0 0.0
  %400 = vmatprep.subr.mxu0 0.0
  %401 = vmatpush1.msra.mxu0 0.0
  %402 = vmatprep.subr.mxu0 0.0
  %403 = vmatpush1.msra.mxu0 0.0
  %404 = vmatprep.subr.mxu0 0.0
  %405 = vmatpush1.msra.mxu0 0.0
  %406 = vmatprep.subr.mxu0 0.0
  %407 = vmatpush1.msra.mxu0 0.0
  %408 = vmatprep.subr.mxu0 0.0
  %409 = vmatpush1.msra.mxu0 0.0
  %410 = vmatprep.mubr.f32.mxu0 0.0
  %411 = vmatmul.mubr.f32.gmra.mrb[0].mxu0 %v341
  %v412 = vpop.f32.mrb[0].mxu0
  %v413 = vadd.f32 0.0, %v412
  %v414 = vpop.f32.mrb[0].mxu0
  %415 = vmatprep.mubr.f32.mxu0 0.0
  %416 = vmatmul.mubr.f32.gmra.mrb[0].mxu0 %v344
  %v417 = vpop.f32.mrb[0].mxu0
  %v418 = vadd.f32 0.0, %v417
  %v419 = vpop.f32.mrb[0].mxu0
  %420 = vdwg.mxu0
  %v421 = vmul.f32 %v413, 8.0
  %v422 = vmul.f32 %v418, 8.0
  %v423 = vmul.f32 %v327, %v106
  %v424 = vmul.f32 %v329, %v111
  %v425 = vadd.f32 %v421, %v423
  %v426 = vadd.f32 %v422, %v424
  %v427 = vrcp.pop %v338
  %v428 = vmul.f32 %v425, %v427
  %v429 = vrcp.pop %v339
  %v430 = vmul.f32 %v426, %v429
  %v431 = vld [vmem:[%s7] sm:$0x1]
  %v433 = vlaneseq
  %v434 = vshrl.u32 %v433, 7
  %v435 = vsub.s32 0, %v434
  %v436 = vrot.slane %v431, %v435
  %v438 = vadd.f32 %v428, %v436
  %v439 = vadd.f32 %v430, %v436
  %440 = vst.msk [vmem:[%s8] sm:$0xff] %vm140, %v438
  %441 = vst.msk [vmem:[%s8 + $0x8] sm:$0xff] %vm140, %v439
  // Predicated region
  $region34: #{gat_layer_forward.3} parent=0 // pred_check
    _
  $region35: #{gat_layer_forward.3} parent=0 // pred_check_branch
    %443 = sbr.rel (0) target = $region37
  $region36: #{gat_layer_forward.3} parent=0 // pred_region
    _
  $region37: #{gat_layer_forward.3} parent=0 // pred_fallthru
    _
  // Predicated region
  $region38: #{gat_layer_forward.3} parent=0 // pred_check
    _
  $region39: #{gat_layer_forward.3} parent=0 // pred_check_branch
    %445 = sbr.rel (0) target = $region41
  $region40: #{gat_layer_forward.3} parent=0 // pred_region
    _
  $region41: #{gat_layer_forward.3} parent=0 // pred_fallthru
    _

// kernel: gat_layer_forward.2
$region0: #{gat_layer_forward.2}
  #allocation0 [shape = 'u32[]', space=smem, size = 0x4, offset = 0x4, fixed_abs, tag = 'smem constant byte address 0x4 - core index']
  #allocation1 [shape = 'u32[144,128]{1,0:T(1,128)}', space=vmem, size = 0x12000, scoped, tag = 'internal scratch']
  %s0 = inlined_call_operand.vmem [shape: f32[8,128], index: 0, kind: input, shape index: {}]
  %s1 = inlined_call_operand.vmem [shape: f32[128,512], index: 1, kind: input, shape index: {}]
  %s2 = inlined_call_operand.vmem [shape: f32[1,512], index: 2, kind: input, shape index: {}]
  %s3 = inlined_call_operand.vmem [shape: f32[8,512], index: 3, kind: output, shape index: {}]
  %s4 = sld [smem:[#allocation0]]
  $region22: #{gat_layer_forward.2} parent=0
    _
  %s6 = ssub.s32 1, %s4
  %s7 = scalar_select 0, %s6, %s4
  // Predicated region
  $region2: #{gat_layer_forward.2} parent=0 // pred_check
    _
  $region3: #{gat_layer_forward.2} parent=0 // pred_check_branch
    %9 = sbr.rel (0) target = $region5
  $region4: #{gat_layer_forward.2} parent=0 // pred_region
    _
  $region5: #{gat_layer_forward.2} parent=0 // pred_fallthru
    _
  // Predicated region
  $region6: #{gat_layer_forward.2} parent=0 // pred_check
    _
  $region7: #{gat_layer_forward.2} parent=0 // pred_check_branch
    %11 = sbr.rel (0) target = $region9
  $region8: #{gat_layer_forward.2} parent=0 // pred_region
    _
  $region9: #{gat_layer_forward.2} parent=0 // pred_fallthru
    _
  // Predicated region
  $region10: #{gat_layer_forward.2} parent=0 // pred_check
    _
  $region11: #{gat_layer_forward.2} parent=0 // pred_check_branch
    %13 = sbr.rel (0) target = $region13
  $region12: #{gat_layer_forward.2} parent=0 // pred_region
    _
  $region13: #{gat_layer_forward.2} parent=0 // pred_fallthru
    _
  %v14 = vld [vmem:[%s0] sm:$0xff]
  %v15 = vld [vmem:[%s1] sm:$0xff]
  %v16 = vld [vmem:[%s1 + $0x8] sm:$0xff]
  %v17 = vld [vmem:[%s1 + $0x10] sm:$0xff]
  %v18 = vld [vmem:[%s1 + $0x18] sm:$0xff]
  %v19 = vld [vmem:[%s1 + $0x20] sm:$0xff]
  %v20 = vld [vmem:[%s1 + $0x28] sm:$0xff]
  %v21 = vld [vmem:[%s1 + $0x30] sm:$0xff]
  %v22 = vld [vmem:[%s1 + $0x38] sm:$0xff]
  %v23 = vld [vmem:[%s1 + $0x40] sm:$0xff]
  %v24 = vld [vmem:[%s1 + $0x48] sm:$0xff]
  %v25 = vld [vmem:[%s1 + $0x50] sm:$0xff]
  %v26 = vld [vmem:[%s1 + $0x58] sm:$0xff]
  %v27 = vld [vmem:[%s1 + $0x60] sm:$0xff]
  %v28 = vld [vmem:[%s1 + $0x68] sm:$0xff]
  %v29 = vld [vmem:[%s1 + $0x70] sm:$0xff]
  %v30 = vld [vmem:[%s1 + $0x78] sm:$0xff]
  %v31 = vld [vmem:[%s1 + $0x80] sm:$0xff]
  %v32 = vld [vmem:[%s1 + $0x88] sm:$0xff]
  %v33 = vld [vmem:[%s1 + $0x90] sm:$0xff]
  %v34 = vld [vmem:[%s1 + $0x98] sm:$0xff]
  %v35 = vld [vmem:[%s1 + $0xa0] sm:$0xff]
  %v36 = vld [vmem:[%s1 + $0xa8] sm:$0xff]
  %v37 = vld [vmem:[%s1 + $0xb0] sm:$0xff]
  %v38 = vld [vmem:[%s1 + $0xb8] sm:$0xff]
  %v39 = vld [vmem:[%s1 + $0xc0] sm:$0xff]
  %v40 = vld [vmem:[%s1 + $0xc8] sm:$0xff]
  %v41 = vld [vmem:[%s1 + $0xd0] sm:$0xff]
  %v42 = vld [vmem:[%s1 + $0xd8] sm:$0xff]
  %v43 = vld [vmem:[%s1 + $0xe0] sm:$0xff]
  %v44 = vld [vmem:[%s1 + $0xe8] sm:$0xff]
  %v45 = vld [vmem:[%s1 + $0xf0] sm:$0xff]
  %v46 = vld [vmem:[%s1 + $0xf8] sm:$0xff]
  %v47 = vld [vmem:[%s1 + $0x100] sm:$0xff]
  %v48 = vld [vmem:[%s1 + $0x108] sm:$0xff]
  %v49 = vld [vmem:[%s1 + $0x110] sm:$0xff]
  %v50 = vld [vmem:[%s1 + $0x118] sm:$0xff]
  %v51 = vld [vmem:[%s1 + $0x120] sm:$0xff]
  %v52 = vld [vmem:[%s1 + $0x128] sm:$0xff]
  %v53 = vld [vmem:[%s1 + $0x130] sm:$0xff]
  %v54 = vld [vmem:[%s1 + $0x138] sm:$0xff]
  %v55 = vld [vmem:[%s1 + $0x140] sm:$0xff]
  %v56 = vld [vmem:[%s1 + $0x148] sm:$0xff]
  %v57 = vld [vmem:[%s1 + $0x150] sm:$0xff]
  %v58 = vld [vmem:[%s1 + $0x158] sm:$0xff]
  %v59 = vld [vmem:[%s1 + $0x160] sm:$0xff]
  %v60 = vld [vmem:[%s1 + $0x168] sm:$0xff]
  %v61 = vld [vmem:[%s1 + $0x170] sm:$0xff]
  %v62 = vld [vmem:[%s1 + $0x178] sm:$0xff]
  %v63 = vld [vmem:[%s1 + $0x180] sm:$0xff]
  %v64 = vld [vmem:[%s1 + $0x188] sm:$0xff]
  %v65 = vld [vmem:[%s1 + $0x190] sm:$0xff]
  %v66 = vld [vmem:[%s1 + $0x198] sm:$0xff]
  %v67 = vld [vmem:[%s1 + $0x1a0] sm:$0xff]
  %v68 = vld [vmem:[%s1 + $0x1a8] sm:$0xff]
  %v69 = vld [vmem:[%s1 + $0x1b0] sm:$0xff]
  %v70 = vld [vmem:[%s1 + $0x1b8] sm:$0xff]
  %v71 = vld [vmem:[%s1 + $0x1c0] sm:$0xff]
  %v72 = vld [vmem:[%s1 + $0x1c8] sm:$0xff]
  %v73 = vld [vmem:[%s1 + $0x1d0] sm:$0xff]
  %v74 = vld [vmem:[%s1 + $0x1d8] sm:$0xff]
  %v75 = vld [vmem:[%s1 + $0x1e0] sm:$0xff]
  %v76 = vld [vmem:[%s1 + $0x1e8] sm:$0xff]
  %v77 = vld [vmem:[%s1 + $0x1f0] sm:$0xff]
  %v78 = vld [vmem:[%s1 + $0x1f8] sm:$0xff]
  %v79 = vld [vmem:[%s2] sm:$0xf]
  %v81 = vlaneseq
  %v82 = vshrl.u32 %v81, 7
  %v83 = vsub.s32 0, %v82
  %v84 = vrot.slane %v79, %v83
  %v85 = vlaneseq
  %v86 = vshrl.u32 %v85, 7
  %v87 = vsub.s32 1, %v86
  %v88 = vrot.slane %v79, %v87
  %v89 = vlaneseq
  %v90 = vshrl.u32 %v89, 7
  %v91 = vsub.s32 2, %v90
  %v92 = vrot.slane %v79, %v91
  %v93 = vlaneseq
  %v94 = vshrl.u32 %v93, 7
  %v95 = vsub.s32 3, %v94
  %v96 = vrot.slane %v79, %v95
  %101 = vmatprep.subr.mxu0 %v16
  %102 = vmatpush1.msra.mxu0 %v15
  %103 = vmatprep.subr.mxu0 %v20
  %104 = vmatpush1.msra.mxu0 %v19
  %105 = vmatprep.subr.mxu0 %v24
  %106 = vmatpush1.msra.mxu0 %v23
  %107 = vmatprep.subr.mxu0 %v28
  %108 = vmatpush1.msra.mxu0 %v27
  %109 = vmatprep.subr.mxu0 %v32
  %110 = vmatpush1.msra.mxu0 %v31
  %111 = vmatprep.subr.mxu0 %v36
  %112 = vmatpush1.msra.mxu0 %v35
  %113 = vmatprep.subr.mxu0 %v40
  %114 = vmatpush1.msra.mxu0 %v39
  %115 = vmatprep.subr.mxu0 %v44
  %116 = vmatpush1.msra.mxu0 %v43
  %117 = vmatprep.subr.mxu0 %v48
  %118 = vmatpush1.msra.mxu0 %v47
  %119 = vmatprep.subr.mxu0 %v52
  %120 = vmatpush1.msra.mxu0 %v51
  %121 = vmatprep.subr.mxu0 %v56
  %122 = vmatpush1.msra.mxu0 %v55
  %123 = vmatprep.subr.mxu0 %v60
  %124 = vmatpush1.msra.mxu0 %v59
  %125 = vmatprep.subr.mxu0 %v64
  %126 = vmatpush1.msra.mxu0 %v63
  %127 = vmatprep.subr.mxu0 %v68
  %128 = vmatpush1.msra.mxu0 %v67
  %129 = vmatprep.subr.mxu0 %v72
  %130 = vmatpush1.msra.mxu0 %v71
  %131 = vmatprep.subr.mxu0 %v76
  %132 = vmatpush1.msra.mxu0 %v75
  %133 = vmatprep.subr.mxu0 0.0
  %134 = vmatpush1.msra.mxu0 0.0
  %135 = vmatprep.subr.mxu0 0.0
  %136 = vmatpush1.msra.mxu0 0.0
  %137 = vmatprep.subr.mxu0 0.0
  %138 = vmatpush1.msra.mxu0 0.0
  %139 = vmatprep.subr.mxu0 0.0
  %140 = vmatpush1.msra.mxu0 0.0
  %141 = vmatprep.subr.mxu0 0.0
  %142 = vmatpush1.msra.mxu0 0.0
  %143 = vmatprep.subr.mxu0 0.0
  %144 = vmatpush1.msra.mxu0 0.0
  %145 = vmatprep.subr.mxu0 0.0
  %146 = vmatpush1.msra.mxu0 0.0
  %147 = vmatprep.subr.mxu0 0.0
  %148 = vmatpush1.msra.mxu0 0.0
  %149 = vmatprep.subr.mxu0 0.0
  %150 = vmatpush1.msra.mxu0 0.0
  %151 = vmatprep.subr.mxu0 0.0
  %152 = vmatpush1.msra.mxu0 0.0
  %153 = vmatprep.subr.mxu0 0.0
  %154 = vmatpush1.msra.mxu0 0.0
  %155 = vmatprep.subr.mxu0 0.0
  %156 = vmatpush1.msra.mxu0 0.0
  %157 = vmatprep.subr.mxu0 0.0
  %158 = vmatpush1.msra.mxu0 0.0
  %159 = vmatprep.subr.mxu0 0.0
  %160 = vmatpush1.msra.mxu0 0.0
  %161 = vmatprep.subr.mxu0 0.0
  %162 = vmatpush1.msra.mxu0 0.0
  %163 = vmatprep.subr.mxu0 0.0
  %164 = vmatpush1.msra.mxu0 0.0
  %165 = vmatprep.mubr.f32.mxu0 0.0
  %166 = vmatmul.mubr.f32.gmra.mrb[0].mxu0 %v14
  %v167 = vpop.f32.mrb[0].mxu0
  %v168 = vadd.f32 %v84, %v167
  %v169 = vpop.f32.mrb[0].mxu0
  %v170 = vadd.f32 %v88, %v169
  %171 = vdwg.mxu0
  %172 = vmatprep.subr.mxu0 %v18
  %173 = vmatpush1.msra.mxu0 %v17
  %174 = vmatprep.subr.mxu0 %v22
  %175 = vmatpush1.msra.mxu0 %v21
  %176 = vmatprep.subr.mxu0 %v26
  %177 = vmatpush1.msra.mxu0 %v25
  %178 = vmatprep.subr.mxu0 %v30
  %179 = vmatpush1.msra.mxu0 %v29
  %180 = vmatprep.subr.mxu0 %v34
  %181 = vmatpush1.msra.mxu0 %v33
  %182 = vmatprep.subr.mxu0 %v38
  %183 = vmatpush1.msra.mxu0 %v37
  %184 = vmatprep.subr.mxu0 %v42
  %185 = vmatpush1.msra.mxu0 %v41
  %186 = vmatprep.subr.mxu0 %v46
  %187 = vmatpush1.msra.mxu0 %v45
  %188 = vmatprep.subr.mxu0 %v50
  %189 = vmatpush1.msra.mxu0 %v49
  %190 = vmatprep.subr.mxu0 %v54
  %191 = vmatpush1.msra.mxu0 %v53
  %192 = vmatprep.subr.mxu0 %v58
  %193 = vmatpush1.msra.mxu0 %v57
  %194 = vmatprep.subr.mxu0 %v62
  %195 = vmatpush1.msra.mxu0 %v61
  %196 = vmatprep.subr.mxu0 %v66
  %197 = vmatpush1.msra.mxu0 %v65
  %198 = vmatprep.subr.mxu0 %v70
  %199 = vmatpush1.msra.mxu0 %v69
  %200 = vmatprep.subr.mxu0 %v74
  %201 = vmatpush1.msra.mxu0 %v73
  %202 = vmatprep.subr.mxu0 %v78
  %203 = vmatpush1.msra.mxu0 %v77
  %204 = vmatprep.subr.mxu0 0.0
  %205 = vmatpush1.msra.mxu0 0.0
  %206 = vmatprep.subr.mxu0 0.0
  %207 = vmatpush1.msra.mxu0 0.0
  %208 = vmatprep.subr.mxu0 0.0
  %209 = vmatpush1.msra.mxu0 0.0
  %210 = vmatprep.subr.mxu0 0.0
  %211 = vmatpush1.msra.mxu0 0.0
  %212 = vmatprep.subr.mxu0 0.0
  %213 = vmatpush1.msra.mxu0 0.0
  %214 = vmatprep.subr.mxu0 0.0
  %215 = vmatpush1.msra.mxu0 0.0
  %216 = vmatprep.subr.mxu0 0.0
  %217 = vmatpush1.msra.mxu0 0.0
  %218 = vmatprep.subr.mxu0 0.0
  %219 = vmatpush1.msra.mxu0 0.0
  %220 = vmatprep.subr.mxu0 0.0
  %221 = vmatpush1.msra.mxu0 0.0
  %222 = vmatprep.subr.mxu0 0.0
  %223 = vmatpush1.msra.mxu0 0.0
  %224 = vmatprep.subr.mxu0 0.0
  %225 = vmatpush1.msra.mxu0 0.0
  %226 = vmatprep.subr.mxu0 0.0
  %227 = vmatpush1.msra.mxu0 0.0
  %228 = vmatprep.subr.mxu0 0.0
  %229 = vmatpush1.msra.mxu0 0.0
  %230 = vmatprep.subr.mxu0 0.0
  %231 = vmatpush1.msra.mxu0 0.0
  %232 = vmatprep.subr.mxu0 0.0
  %233 = vmatpush1.msra.mxu0 0.0
  %234 = vmatprep.subr.mxu0 0.0
  %235 = vmatpush1.msra.mxu0 0.0
  %236 = vmatprep.mubr.f32.mxu0 0.0
  %237 = vmatmul.mubr.f32.gmra.mrb[0].mxu0 %v14
  %v238 = vpop.f32.mrb[0].mxu0
  %v239 = vadd.f32 %v92, %v238
  %v240 = vpop.f32.mrb[0].mxu0
  %v241 = vadd.f32 %v96, %v240
  %242 = vdwg.mxu0
  %243 = vst [vmem:[%s3] sm:$0xff] %v168
  %244 = vst [vmem:[%s3 + $0x8] sm:$0xff] %v170
  %245 = vst [vmem:[%s3 + $0x10] sm:$0xff] %v239
  %246 = vst [vmem:[%s3 + $0x18] sm:$0xff] %v241
  // Predicated region
  $region14: #{gat_layer_forward.2} parent=0 // pred_check
    _
  $region15: #{gat_layer_forward.2} parent=0 // pred_check_branch
    %248 = sbr.rel (0) target = $region17
  $region16: #{gat_layer_forward.2} parent=0 // pred_region
    _
  $region17: #{gat_layer_forward.2} parent=0 // pred_fallthru
    _
  // Predicated region
  $region18: #{gat_layer_forward.2} parent=0 // pred_check
    _
  $region19: #{gat_layer_forward.2} parent=0 // pred_check_branch
    %250 = sbr.rel (0) target = $region21
  $region20: #{gat_layer_forward.2} parent=0 // pred_region
    _
  $region21: #{gat_layer_forward.2} parent=0 // pred_fallthru
    _

</llo_original>
